<compile_context>
chip_gen: v6e
topology: v6e:2x2x1
jax: 0.10.0
libtpu: 0.0.40
codegen_flags: <defaults>
</compile_context>

<pallas_src>
import functools

import jax
import jax.numpy as jnp
from jax import lax
from jax.experimental import pallas as pl
from jax.experimental.pallas import tpu as pltpu


# ----------------------------------------------------------------------------
# Fully fused kernel:
#   for each r in the block (r = (n, hp)):
#     y  = relu(Wc @ P[r] + b) * bn_scale + bn_shift        # (64, 110)
#     o  = y @ Wl + bl                                      # (64, 30)
# ----------------------------------------------------------------------------
def _fused_kernel(p_ref, wt_ref, b_ref, scale_ref, shift_ref,
                  lw_ref, lb_ref, o_ref):
    wt = wt_ref[...]          # (64, K)   conv weight (out_c major)
    lw = lw_ref[...]          # (Wp, 30)  linear weight
    b = b_ref[...]            # (64, 1)
    scale = scale_ref[...]    # (64, 1)
    shift = shift_ref[...]    # (64, 1)
    lb = lb_ref[...]          # (1, 30)

    for r in range(p_ref.shape[0]):                       # static, tiny unroll
        pr = p_ref[r]                                      # (K, Wp)
        y = jnp.dot(wt, pr, preferred_element_type=jnp.float32)  # (64, Wp)
        y = jnp.maximum(y + b, 0.0)                        # conv bias + ReLU
        y = y * scale + shift                              # fused BatchNorm
        o_ref[r] = (jnp.dot(y, lw, preferred_element_type=jnp.float32)
                    + lb).astype(o_ref.dtype)              # (64, 30)


def fused_net(patches, wt, b_col, scale_col, shift_col, lw, lb, *, grid_r):
    R, K, Wp = patches.shape
    C = wt.shape[0]
    N_out = lw.shape[1]
    assert R % grid_r == 0
    Rb = R // grid_r
    return pl.pallas_call(
        _fused_kernel,
        out_shape=jax.ShapeDtypeStruct((R, C, N_out), jnp.float32),
        grid_spec=pltpu.PrefetchScalarGridSpec(
            num_scalar_prefetch=0,
            grid=(grid_r,),
            in_specs=[
                pl.BlockSpec((Rb, K, Wp), lambda i: (i, 0, 0)),
                pl.BlockSpec((C, K), lambda i: (0, 0)),
                pl.BlockSpec((C, 1), lambda i: (0, 0)),
                pl.BlockSpec((C, 1), lambda i: (0, 0)),
                pl.BlockSpec((C, 1), lambda i: (0, 0)),
                pl.BlockSpec((Wp, N_out), lambda i: (0, 0)),
                pl.BlockSpec((1, N_out), lambda i: (0, 0)),
            ],
            out_specs=pl.BlockSpec((Rb, C, N_out), lambda i: (i, 0, 0)),
        ),
        compiler_params=pltpu.CompilerParams(
            dimension_semantics=("parallel",)),
    )(patches, wt, b_col, scale_col, shift_col, lw, lb)


# ----------------------------------------------------------------------------
# Pooling-aware im2col: only the conv output positions that survive
# MaxPool2d(kernel=1, stride=2) are materialized.  Layout: (n*hp, K, wp),
# K ordered (in_c, kh, kw) to match conv_w.reshape(64, -1).
# ----------------------------------------------------------------------------
def _im2col_pooled(x, kh, kw, pad):
    n, c, h, w = x.shape
    xp = jnp.pad(x, ((0, 0), (0, 0), (pad, pad), (pad, pad)))
    ho = h + 2 * pad - kh + 1
    wo = w + 2 * pad - kw + 1
    hp = (ho + 1) // 2
    wp = (wo + 1) // 2
    cols = []
    for i in range(kh):
        for j in range(kw):
            cols.append(xp[:, :, i:i + ho:2, j:j + wo:2])   # (N, C, Hp, Wp)
    pat = jnp.stack(cols, axis=2)                           # (N, C, kh*kw, Hp, Wp)
    pat = pat.transpose(0, 3, 1, 2, 4)                      # (N, Hp, C, kh*kw, Wp)
    pat = pat.reshape(n * hp, c * kh * kw, wp)              # (R, K, Wp)
    return pat, hp, wp


@functools.partial(jax.jit, static_argnames=())
def net_forward(x, params):
    n, c_in, h, w = x.shape
    conv_w, conv_b, bn_gamma, bn_beta, bn_mean, bn_var, lin_w, lin_b = params
    c_out = conv_w.shape[0]
    n_lin = lin_w.shape[0]

    patches, hp, wp = _im2col_pooled(x, 7, 7, pad=1)        # (N*Hp, 147, Wp)
    assert wp == lin_w.shape[1], (wp, lin_w.shape)

    wt = conv_w.reshape(c_out, -1).astype(jnp.float32)      # (64, 147)
    eps = 1e-5
    scale = bn_gamma / jnp.sqrt(bn_var + eps)               # (64,)
    shift = bn_beta - bn_mean * scale                       # (64,)

    R = n * hp
    grid_r = 2 if (R % 2 == 0 and R >= 2) else 1            # 2-way for v7x TCs

    out = fused_net(
        patches.astype(jnp.float32),
        wt,
        conv_b.reshape(c_out, 1).astype(jnp.float32),
        scale.reshape(c_out, 1).astype(jnp.float32),
        shift.reshape(c_out, 1).astype(jnp.float32),
        lin_w.T.astype(jnp.float32),                        # (Wp, 30)
        lin_b.reshape(1, n_lin).astype(jnp.float32),
        grid_r=grid_r,
    )                                                       # (N*Hp, 64, 30)

    # Tiny final reorg (7.5K floats) back to PyTorch's (N, 64, Hp, 30).
    return out.reshape(n, hp, c_out, n_lin).transpose(0, 2, 1, 3)


# ----------------------------------------------------------------------------
# Pure-JAX reference (eval-mode PyTorch semantics)
# ----------------------------------------------------------------------------
def _reference(x, params):
    conv_w, conv_b, bn_gamma, bn_beta, bn_mean, bn_var, lin_w, lin_b = params
    y = lax.conv_general_dilated(
        x, conv_w, window_strides=(1, 1), padding=((1, 1), (1, 1)),
        dimension_numbers=("NCHW", "OIHW", "NCHW"))
    y = y + conv_b.reshape(1, -1, 1, 1)
    y = jnp.maximum(y, 0.0)
    y = y[:, :, ::2, ::2]
    eps = 1e-5
    y = (y - bn_mean.reshape(1, -1, 1, 1)) / jnp.sqrt(
        bn_var.reshape(1, -1, 1, 1) + eps)
    y = y * bn_gamma.reshape(1, -1, 1, 1) + bn_beta.reshape(1, -1, 1, 1)
    return jnp.einsum("nchw,ow->ncho", y, lin_w) + lin_b


def init_params(key):
    ks = jax.random.split(key, 8)
    conv_w = jax.random.normal(ks[0], (64, 3, 7, 7), jnp.float32) * 0.05
    conv_b = jax.random.normal(ks[1], (64,), jnp.float32) * 0.05
    bn_gamma = 1.0 + 0.1 * jax.random.normal(ks[2], (64,), jnp.float32)
    bn_beta = 0.1 * jax.random.normal(ks[3], (64,), jnp.float32)
    bn_mean = 0.1 * jax.random.normal(ks[4], (64,), jnp.float32)
    bn_var = jnp.abs(1.0 + 0.1 * jax.random.normal(ks[5], (64,), jnp.float32))
    lin_w = jax.random.normal(ks[6], (30, 110), jnp.float32) * 0.05
    lin_b = jax.random.normal(ks[7], (30,), jnp.float32) * 0.05
    return (conv_w, conv_b, bn_gamma, bn_beta, bn_mean, bn_var, lin_w, lin_b)


if __name__ == "__main__":
    key = jax.random.PRNGKey(0)
    kx, kp = jax.random.split(key)
    # W must be 224 so that conv (W+2-7+1=220) then stride-2 pool gives 110,
    # matching Linear(110, 30).  H kept small (8 -> Hp=2), batch=2.
    x = jax.random.normal(kx, (2, 3, 8, 224), jnp.float32)
    params = init_params(kp)

    out = net_forward(x, params)
    out = jax.block_until_ready(out)
    assert out.shape == (2, 64, 2, 30), out.shape

    ref = _reference(x, params)
    assert jnp.allclose(out, ref, rtol=1e-3, atol=1e-3), float(
        jnp.max(jnp.abs(out - ref)))

    print("KERNEL_OK")
</pallas_src>

<mosaic_0001>
module attributes {stable_mosaic.version = 11 : i64} {
  func.func @_fused_kernel(%arg0: i32, %arg1: memref<2x147x110xf32, #tpu.memory_space<vmem>>, %arg2: memref<64x147xf32, #tpu.memory_space<vmem>>, %arg3: memref<64x1xf32, #tpu.memory_space<vmem>>, %arg4: memref<64x1xf32, #tpu.memory_space<vmem>>, %arg5: memref<64x1xf32, #tpu.memory_space<vmem>>, %arg6: memref<110x30xf32, #tpu.memory_space<vmem>>, %arg7: memref<1x30xf32, #tpu.memory_space<vmem>>, %arg8: memref<2x64x30xf32, #tpu.memory_space<vmem>>) attributes {dimension_semantics = [#tpu.dimension_semantics<parallel>], iteration_bounds = array<i64: 2>, scalar_prefetch = 0 : i64, scratch_operands = 0 : i64, tpu.core_type = #tpu.core_type<tc>, window_params = [{transform_indices = @transform_0, window_bounds = array<i64: 2, 147, 110>}, {pipeline_mode = #tpu.pipeline_mode<synchronous>, transform_indices = @transform_1, window_bounds = array<i64: 64, 147>}, {pipeline_mode = #tpu.pipeline_mode<synchronous>, transform_indices = @transform_2, window_bounds = array<i64: 64, 1>}, {pipeline_mode = #tpu.pipeline_mode<synchronous>, transform_indices = @transform_3, window_bounds = array<i64: 64, 1>}, {pipeline_mode = #tpu.pipeline_mode<synchronous>, transform_indices = @transform_4, window_bounds = array<i64: 64, 1>}, {pipeline_mode = #tpu.pipeline_mode<synchronous>, transform_indices = @transform_5, window_bounds = array<i64: 110, 30>}, {pipeline_mode = #tpu.pipeline_mode<synchronous>, transform_indices = @transform_6, window_bounds = array<i64: 1, 30>}, {transform_indices = @transform_7, window_bounds = array<i64: 2, 64, 30>}]} {
    %c0 = arith.constant 0 : index
    %c0_0 = arith.constant 0 : index
    %0 = vector.load %arg2[%c0, %c0_0] : memref<64x147xf32, #tpu.memory_space<vmem>>, vector<64x147xf32>
    %c0_1 = arith.constant 0 : index
    %c0_2 = arith.constant 0 : index
    %1 = vector.load %arg6[%c0_1, %c0_2] : memref<110x30xf32, #tpu.memory_space<vmem>>, vector<110x30xf32>
    %c0_3 = arith.constant 0 : index
    %c0_4 = arith.constant 0 : index
    %2 = vector.load %arg3[%c0_3, %c0_4] : memref<64x1xf32, #tpu.memory_space<vmem>>, vector<64x1xf32>
    %c0_5 = arith.constant 0 : index
    %c0_6 = arith.constant 0 : index
    %3 = vector.load %arg4[%c0_5, %c0_6] : memref<64x1xf32, #tpu.memory_space<vmem>>, vector<64x1xf32>
    %c0_7 = arith.constant 0 : index
    %c0_8 = arith.constant 0 : index
    %4 = vector.load %arg5[%c0_7, %c0_8] : memref<64x1xf32, #tpu.memory_space<vmem>>, vector<64x1xf32>
    %c0_9 = arith.constant 0 : index
    %c0_10 = arith.constant 0 : index
    %5 = vector.load %arg7[%c0_9, %c0_10] : memref<1x30xf32, #tpu.memory_space<vmem>>, vector<1x30xf32>
    %c0_11 = arith.constant 0 : index
    %c0_12 = arith.constant 0 : index
    %c0_13 = arith.constant 0 : index
    %6 = vector.load %arg1[%c0_11, %c0_12, %c0_13] : memref<2x147x110xf32, #tpu.memory_space<vmem>>, vector<1x147x110xf32>
    %7 = vector.shape_cast %6 : vector<1x147x110xf32> to vector<147x110xf32>
    %cst = arith.constant dense<0.000000e+00> : vector<64x110xf32>
    %8 = tpu.matmul %0, %7, %cst {dimension_numbers = #tpu.dot_dimension_numbers<[1], [0], [0], [1], [0, 0, 1, 1], [], []>} : vector<64x147xf32>, vector<147x110xf32>, vector<64x110xf32> -> vector<64x110xf32>
    %9 = vector.broadcast %2 : vector<64x1xf32> to vector<64x110xf32>
    %10 = arith.addf %8, %9 : vector<64x110xf32>
    %cst_14 = arith.constant 0.000000e+00 : f32
    %11 = vector.broadcast %cst_14 : f32 to vector<64x110xf32>
    %12 = arith.maximumf %10, %11 : vector<64x110xf32>
    %13 = vector.broadcast %3 : vector<64x1xf32> to vector<64x110xf32>
    %14 = arith.mulf %12, %13 : vector<64x110xf32>
    %15 = vector.broadcast %4 : vector<64x1xf32> to vector<64x110xf32>
    %16 = arith.addf %14, %15 : vector<64x110xf32>
    %cst_15 = arith.constant dense<0.000000e+00> : vector<64x30xf32>
    %17 = tpu.matmul %16, %1, %cst_15 {dimension_numbers = #tpu.dot_dimension_numbers<[1], [0], [0], [1], [0, 0, 1, 1], [], []>} : vector<64x110xf32>, vector<110x30xf32>, vector<64x30xf32> -> vector<64x30xf32>
    %18 = vector.broadcast %5 : vector<1x30xf32> to vector<64x30xf32>
    %19 = arith.addf %17, %18 : vector<64x30xf32>
    %c0_16 = arith.constant 0 : index
    %c0_17 = arith.constant 0 : index
    %c0_18 = arith.constant 0 : index
    %20 = vector.load %arg8[%c0_16, %c0_17, %c0_18] : memref<2x64x30xf32, #tpu.memory_space<vmem>>, vector<1x64x30xf32>
    %21 = vector.shape_cast %20 : vector<1x64x30xf32> to vector<64x30xf32>
    %22 = vector.shape_cast %19 : vector<64x30xf32> to vector<1x64x30xf32>
    tpu.vector_store %arg8[%c0_16, %c0_17, %c0_18], %22 {strides = array<i32>} : memref<2x64x30xf32, #tpu.memory_space<vmem>>, vector<1x64x30xf32>,
    %c1 = arith.constant 1 : index
    %c0_19 = arith.constant 0 : index
    %c0_20 = arith.constant 0 : index
    %23 = vector.load %arg1[%c1, %c0_19, %c0_20] : memref<2x147x110xf32, #tpu.memory_space<vmem>>, vector<1x147x110xf32>
    %24 = vector.shape_cast %23 : vector<1x147x110xf32> to vector<147x110xf32>
    %cst_21 = arith.constant dense<0.000000e+00> : vector<64x110xf32>
    %25 = tpu.matmul %0, %24, %cst_21 {dimension_numbers = #tpu.dot_dimension_numbers<[1], [0], [0], [1], [0, 0, 1, 1], [], []>} : vector<64x147xf32>, vector<147x110xf32>, vector<64x110xf32> -> vector<64x110xf32>
    %26 = vector.broadcast %2 : vector<64x1xf32> to vector<64x110xf32>
    %27 = arith.addf %25, %26 : vector<64x110xf32>
    %cst_22 = arith.constant 0.000000e+00 : f32
    %28 = vector.broadcast %cst_22 : f32 to vector<64x110xf32>
    %29 = arith.maximumf %27, %28 : vector<64x110xf32>
    %30 = vector.broadcast %3 : vector<64x1xf32> to vector<64x110xf32>
    %31 = arith.mulf %29, %30 : vector<64x110xf32>
    %32 = vector.broadcast %4 : vector<64x1xf32> to vector<64x110xf32>
    %33 = arith.addf %31, %32 : vector<64x110xf32>
    %cst_23 = arith.constant dense<0.000000e+00> : vector<64x30xf32>
    %34 = tpu.matmul %33, %1, %cst_23 {dimension_numbers = #tpu.dot_dimension_numbers<[1], [0], [0], [1], [0, 0, 1, 1], [], []>} : vector<64x110xf32>, vector<110x30xf32>, vector<64x30xf32> -> vector<64x30xf32>
    %35 = vector.broadcast %5 : vector<1x30xf32> to vector<64x30xf32>
    %36 = arith.addf %34, %35 : vector<64x30xf32>
    %c1_24 = arith.constant 1 : index
    %c0_25 = arith.constant 0 : index
    %c0_26 = arith.constant 0 : index
    %37 = vector.load %arg8[%c1_24, %c0_25, %c0_26] : memref<2x64x30xf32, #tpu.memory_space<vmem>>, vector<1x64x30xf32>
    %38 = vector.shape_cast %37 : vector<1x64x30xf32> to vector<64x30xf32>
    %39 = vector.shape_cast %36 : vector<64x30xf32> to vector<1x64x30xf32>
    tpu.vector_store %arg8[%c1_24, %c0_25, %c0_26], %39 {strides = array<i32>} : memref<2x64x30xf32, #tpu.memory_space<vmem>>, vector<1x64x30xf32>,
    return
  }
  func.func @transform_0(%arg0: i32) -> (i32, i32, i32) {
    %c0_i32 = arith.constant 0 : i32
    %c0_i32_0 = arith.constant 0 : i32
    %c0_i32_1 = arith.constant 0 : i32
    return %arg0, %c0_i32, %c0_i32_0 : i32, i32, i32
  }
  func.func @transform_1(%arg0: i32) -> (i32, i32) {
    %c0_i32 = arith.constant 0 : i32
    %c0_i32_0 = arith.constant 0 : i32
    %c0_i32_1 = arith.constant 0 : i32
    return %c0_i32, %c0_i32_0 : i32, i32
  }
  func.func @transform_2(%arg0: i32) -> (i32, i32) {
    %c0_i32 = arith.constant 0 : i32
    %c0_i32_0 = arith.constant 0 : i32
    %c0_i32_1 = arith.constant 0 : i32
    return %c0_i32, %c0_i32_0 : i32, i32
  }
  func.func @transform_3(%arg0: i32) -> (i32, i32) {
    %c0_i32 = arith.constant 0 : i32
    %c0_i32_0 = arith.constant 0 : i32
    %c0_i32_1 = arith.constant 0 : i32
    return %c0_i32, %c0_i32_0 : i32, i32
  }
  func.func @transform_4(%arg0: i32) -> (i32, i32) {
    %c0_i32 = arith.constant 0 : i32
    %c0_i32_0 = arith.constant 0 : i32
    %c0_i32_1 = arith.constant 0 : i32
    return %c0_i32, %c0_i32_0 : i32, i32
  }
  func.func @transform_5(%arg0: i32) -> (i32, i32) {
    %c0_i32 = arith.constant 0 : i32
    %c0_i32_0 = arith.constant 0 : i32
    %c0_i32_1 = arith.constant 0 : i32
    return %c0_i32, %c0_i32_0 : i32, i32
  }
  func.func @transform_6(%arg0: i32) -> (i32, i32) {
    %c0_i32 = arith.constant 0 : i32
    %c0_i32_0 = arith.constant 0 : i32
    %c0_i32_1 = arith.constant 0 : i32
    return %c0_i32, %c0_i32_0 : i32, i32
  }
  func.func @transform_7(%arg0: i32) -> (i32, i32, i32) {
    %c0_i32 = arith.constant 0 : i32
    %c0_i32_0 = arith.constant 0 : i32
    %c0_i32_1 = arith.constant 0 : i32
    return %arg0, %c0_i32, %c0_i32_0 : i32, i32, i32
  }
}

</mosaic_0001>

<llo_original>
// kernel: net_forward.1
$region0: #{net_forward.1}
  #allocation0 [shape = 'u32[]', space=smem, size = 0x4, offset = 0x4, fixed_abs, tag = 'smem constant byte address 0x4 - core index']
  #allocation1 [shape = 'u32[144,128]{1,0:T(1,128)}', space=vmem, size = 0x12000, scoped, tag = 'internal scratch']
  %s0 = inlined_call_operand.vmem [shape: f32[4,147,110], index: 0, kind: input, shape index: {}]
  %s1 = inlined_call_operand.vmem [shape: f32[64,147], index: 1, kind: input, shape index: {}]
  %s2 = inlined_call_operand.vmem [shape: f32[64,1], index: 2, kind: input, shape index: {}]
  %s3 = inlined_call_operand.vmem [shape: f32[64,1], index: 3, kind: input, shape index: {}]
  %s4 = inlined_call_operand.vmem [shape: f32[64,1], index: 4, kind: input, shape index: {}]
  %s5 = inlined_call_operand.vmem [shape: f32[110,30], index: 5, kind: input, shape index: {}]
  %s6 = inlined_call_operand.vmem [shape: f32[1,30], index: 6, kind: input, shape index: {}]
  %s7 = inlined_call_operand.vmem [shape: f32[4,64,30], index: 7, kind: output, shape index: {}]
  %s8 = sld [smem:[#allocation0]]
  $region61: #{net_forward.1} parent=0
    _
  %s10 = ssub.s32 1, %s8
  %s11 = scalar_select 0, %s10, %s8
  loop: start=0, step=1, limit=4
  $region2: #{net_forward.1} parent=0 // loop_pre_header
    _
  $region3: #{net_forward.1} parent=0 // loop_header
    %s13 = sphi 0, %s17
    %p14 = scmp.ge.s32.totalorder %s13, 4
    %s23 = sphi 0, %s25
    %s26 = sphi 0, %s23
    %s27 = sphi 0, %s26
    %s43 = sphi 0, %s27
    %s47 = sphi 0, %s47
    %s49 = sphi 0, %s47
    %s50 = sphi 0, %s49
    %s64 = sphi 0, %s50
    %s68 = sphi 0, %s68
    %s70 = sphi 0, %s68
    %s71 = sphi 0, %s70
    %s85 = sphi 0, %s71
    %s89 = sphi 0, %s89
    %s91 = sphi 0, %s89
    %s92 = sphi 0, %s91
    %s106 = sphi 0, %s92
    %s110 = sphi 0, %s110
    %s112 = sphi 0, %s110
    %s113 = sphi 0, %s112
    %s127 = sphi 0, %s113
    %s131 = sphi 0, %s131
    %s133 = sphi 0, %s131
    %s134 = sphi 0, %s133
    %s148 = sphi 0, %s134
    %s152 = sphi 0, %s152
    %s154 = sphi 0, %s152
    %s155 = sphi 0, %s154
    %s169 = sphi 0, %s155
    %s175 = sphi 0, %s177
    %s178 = sphi 0, %s175
    %s179 = sphi 0, %s178
    %s195 = sphi 0, %s179
  $region4: #{net_forward.1} parent=0 // loop_header_branch
    %16 = sbr.rel (%p14) target = $region8
  $region5: #{net_forward.1} parent=0 // loop_body
    %s18 = ssub.s32 %s13, 1
    %s19 = ssub.s32 %s13, 2
    %s20 = sadd.s32 %s13, 1
    %s21 = ssub.s32 %s13, %s20
    %p22 = scmp.eq.s32.totalorder %s21, 0
    %s24 = sadd.s32 %s23, 1
    %s25 = scalar_select %p22, %s23, %s24
    %p28 = pneg %p22
    %p29 = scmp.eq.s32.totalorder %s13, 1
    %p30 = por %p28, %p29
    %p31 = scmp.ne.s32.totalorder %s23, %s26
    %p32 = scmp.eq.s32.totalorder %s13, 0
    %p33 = por %p31, %p32
    %p34 = scmp.ne.s32.totalorder %s23, %s26
    %p35 = scmp.eq.s32.totalorder %s18, 1
    %p36 = por %p34, %p35
    %p37 = scmp.ne.s32.totalorder %s26, %s27
    %p38 = scmp.eq.s32.totalorder %s18, 0
    %p39 = por %p37, %p38
    %p40 = scmp.ne.s32.totalorder %s26, %s27
    %p41 = scmp.eq.s32.totalorder %s19, 1
    %p42 = por %p40, %p41
    %p44 = scmp.ne.s32.totalorder %s27, %s43
    %p45 = scmp.eq.s32.totalorder %s19, 0
    %p46 = por %p44, %p45
    %s48 = sadd.s32 %s47, 1
    %p51 = scmp.eq.s32.totalorder %s13, 1
    %p52 = scmp.ne.s32.totalorder %s47, %s49
    %p53 = scmp.eq.s32.totalorder %s13, 0
    %p54 = por %p52, %p53
    %p55 = scmp.ne.s32.totalorder %s47, %s49
    %p56 = scmp.eq.s32.totalorder %s18, 1
    %p57 = por %p55, %p56
    %p58 = scmp.ne.s32.totalorder %s49, %s50
    %p59 = scmp.eq.s32.totalorder %s18, 0
    %p60 = por %p58, %p59
    %p61 = scmp.ne.s32.totalorder %s49, %s50
    %p62 = scmp.eq.s32.totalorder %s19, 1
    %p63 = por %p61, %p62
    %p65 = scmp.ne.s32.totalorder %s50, %s64
    %p66 = scmp.eq.s32.totalorder %s19, 0
    %p67 = por %p65, %p66
    %s69 = sadd.s32 %s68, 1
    %p72 = scmp.eq.s32.totalorder %s13, 1
    %p73 = scmp.ne.s32.totalorder %s68, %s70
    %p74 = scmp.eq.s32.totalorder %s13, 0
    %p75 = por %p73, %p74
    %p76 = scmp.ne.s32.totalorder %s68, %s70
    %p77 = scmp.eq.s32.totalorder %s18, 1
    %p78 = por %p76, %p77
    %p79 = scmp.ne.s32.totalorder %s70, %s71
    %p80 = scmp.eq.s32.totalorder %s18, 0
    %p81 = por %p79, %p80
    %p82 = scmp.ne.s32.totalorder %s70, %s71
    %p83 = scmp.eq.s32.totalorder %s19, 1
    %p84 = por %p82, %p83
    %p86 = scmp.ne.s32.totalorder %s71, %s85
    %p87 = scmp.eq.s32.totalorder %s19, 0
    %p88 = por %p86, %p87
    %s90 = sadd.s32 %s89, 1
    %p93 = scmp.eq.s32.totalorder %s13, 1
    %p94 = scmp.ne.s32.totalorder %s89, %s91
    %p95 = scmp.eq.s32.totalorder %s13, 0
    %p96 = por %p94, %p95
    %p97 = scmp.ne.s32.totalorder %s89, %s91
    %p98 = scmp.eq.s32.totalorder %s18, 1
    %p99 = por %p97, %p98
    %p100 = scmp.ne.s32.totalorder %s91, %s92
    %p101 = scmp.eq.s32.totalorder %s18, 0
    %p102 = por %p100, %p101
    %p103 = scmp.ne.s32.totalorder %s91, %s92
    %p104 = scmp.eq.s32.totalorder %s19, 1
    %p105 = por %p103, %p104
    %p107 = scmp.ne.s32.totalorder %s92, %s106
    %p108 = scmp.eq.s32.totalorder %s19, 0
    %p109 = por %p107, %p108
    %s111 = sadd.s32 %s110, 1
    %p114 = scmp.eq.s32.totalorder %s13, 1
    %p115 = scmp.ne.s32.totalorder %s110, %s112
    %p116 = scmp.eq.s32.totalorder %s13, 0
    %p117 = por %p115, %p116
    %p118 = scmp.ne.s32.totalorder %s110, %s112
    %p119 = scmp.eq.s32.totalorder %s18, 1
    %p120 = por %p118, %p119
    %p121 = scmp.ne.s32.totalorder %s112, %s113
    %p122 = scmp.eq.s32.totalorder %s18, 0
    %p123 = por %p121, %p122
    %p124 = scmp.ne.s32.totalorder %s112, %s113
    %p125 = scmp.eq.s32.totalorder %s19, 1
    %p126 = por %p124, %p125
    %p128 = scmp.ne.s32.totalorder %s113, %s127
    %p129 = scmp.eq.s32.totalorder %s19, 0
    %p130 = por %p128, %p129
    %s132 = sadd.s32 %s131, 1
    %p135 = scmp.eq.s32.totalorder %s13, 1
    %p136 = scmp.ne.s32.totalorder %s131, %s133
    %p137 = scmp.eq.s32.totalorder %s13, 0
    %p138 = por %p136, %p137
    %p139 = scmp.ne.s32.totalorder %s131, %s133
    %p140 = scmp.eq.s32.totalorder %s18, 1
    %p141 = por %p139, %p140
    %p142 = scmp.ne.s32.totalorder %s133, %s134
    %p143 = scmp.eq.s32.totalorder %s18, 0
    %p144 = por %p142, %p143
    %p145 = scmp.ne.s32.totalorder %s133, %s134
    %p146 = scmp.eq.s32.totalorder %s19, 1
    %p147 = por %p145, %p146
    %p149 = scmp.ne.s32.totalorder %s134, %s148
    %p150 = scmp.eq.s32.totalorder %s19, 0
    %p151 = por %p149, %p150
    %s153 = sadd.s32 %s152, 1
    %p156 = scmp.eq.s32.totalorder %s13, 1
    %p157 = scmp.ne.s32.totalorder %s152, %s154
    %p158 = scmp.eq.s32.totalorder %s13, 0
    %p159 = por %p157, %p158
    %p160 = scmp.ne.s32.totalorder %s152, %s154
    %p161 = scmp.eq.s32.totalorder %s18, 1
    %p162 = por %p160, %p161
    %p163 = scmp.ne.s32.totalorder %s154, %s155
    %p164 = scmp.eq.s32.totalorder %s18, 0
    %p165 = por %p163, %p164
    %p166 = scmp.ne.s32.totalorder %s154, %s155
    %p167 = scmp.eq.s32.totalorder %s19, 1
    %p168 = por %p166, %p167
    %p170 = scmp.ne.s32.totalorder %s155, %s169
    %p171 = scmp.eq.s32.totalorder %s19, 0
    %p172 = por %p170, %p171
    %s173 = ssub.s32 %s13, %s20
    %p174 = scmp.eq.s32.totalorder %s173, 0
    %s176 = sadd.s32 %s175, 1
    %s177 = scalar_select %p174, %s175, %s176
    %p180 = pneg %p174
    %p181 = scmp.eq.s32.totalorder %s13, 1
    %p182 = por %p180, %p181
    %p183 = scmp.ne.s32.totalorder %s175, %s178
    %p184 = scmp.eq.s32.totalorder %s13, 0
    %p185 = por %p183, %p184
    %p186 = scmp.ne.s32.totalorder %s175, %s178
    %p187 = scmp.eq.s32.totalorder %s18, 1
    %p188 = por %p186, %p187
    %p189 = scmp.ne.s32.totalorder %s178, %s179
    %p190 = scmp.eq.s32.totalorder %s18, 0
    %p191 = por %p189, %p190
    %p192 = scmp.ne.s32.totalorder %s178, %s179
    %p193 = scmp.eq.s32.totalorder %s19, 1
    %p194 = por %p192, %p193
    %p196 = scmp.ne.s32.totalorder %s179, %s195
    %p197 = scmp.eq.s32.totalorder %s19, 0
    %p198 = por %p196, %p197
    %p199 = scmp.le.s32.totalorder 1, %s13
    %p200 = scmp.lt.s32.totalorder %s13, 3
    %p201 = pnand %p199, %p200
    %p202 = pneg %p201
    // Predicated region
    $region9: #{net_forward.1} parent=5 // pred_check
      _
    $region10: #{net_forward.1} parent=5 // pred_check_branch
      %204 = sbr.rel (%p201) target = $region12
    $region11: #{net_forward.1} parent=5 // pred_region
      %s205 = ssub.s32 %s13, 1
      // Predicated region
      $region13: #{net_forward.1} parent=11 // pred_check
        %p206 = pneg %p60
      $region14: #{net_forward.1} parent=11 // pred_check_branch
        %208 = sbr.rel (%p206) target = $region16
      $region15: #{net_forward.1} parent=11 // pred_region
        _
      $region16: #{net_forward.1} parent=11 // pred_fallthru
        _
      // Predicated region
      $region17: #{net_forward.1} parent=11 // pred_check
        %p209 = pneg %p81
      $region18: #{net_forward.1} parent=11 // pred_check_branch
        %211 = sbr.rel (%p209) target = $region20
      $region19: #{net_forward.1} parent=11 // pred_region
        _
      $region20: #{net_forward.1} parent=11 // pred_fallthru
        _
      // Predicated region
      $region21: #{net_forward.1} parent=11 // pred_check
        %p212 = pneg %p102
      $region22: #{net_forward.1} parent=11 // pred_check_branch
        %214 = sbr.rel (%p212) target = $region24
      $region23: #{net_forward.1} parent=11 // pred_region
        _
      $region24: #{net_forward.1} parent=11 // pred_fallthru
        _
      // Predicated region
      $region25: #{net_forward.1} parent=11 // pred_check
        %p215 = pneg %p123
      $region26: #{net_forward.1} parent=11 // pred_check_branch
        %217 = sbr.rel (%p215) target = $region28
      $region27: #{net_forward.1} parent=11 // pred_region
        _
      $region28: #{net_forward.1} parent=11 // pred_fallthru
        _
      // Predicated region
      $region29: #{net_forward.1} parent=11 // pred_check
        %p218 = pneg %p144
      $region30: #{net_forward.1} parent=11 // pred_check_branch
        %220 = sbr.rel (%p218) target = $region32
      $region31: #{net_forward.1} parent=11 // pred_region
        _
      $region32: #{net_forward.1} parent=11 // pred_fallthru
        _
      // Predicated region
      $region33: #{net_forward.1} parent=11 // pred_check
        %p221 = pneg %p165
      $region34: #{net_forward.1} parent=11 // pred_check_branch
        %223 = sbr.rel (%p221) target = $region36
      $region35: #{net_forward.1} parent=11 // pred_region
        _
      $region36: #{net_forward.1} parent=11 // pred_fallthru
        _
    $region12: #{net_forward.1} parent=5 // pred_fallthru
      _
    %p224 = scmp.lt.s32.totalorder %s13, 2
    // Predicated region
    $region37: #{net_forward.1} parent=5 // pred_check
      %p225 = pneg %p224
    $region38: #{net_forward.1} parent=5 // pred_check_branch
      %227 = sbr.rel (%p225) target = $region40
    $region39: #{net_forward.1} parent=5 // pred_region
      // Predicated region
      $region41: #{net_forward.1} parent=39 // pred_check
        %p228 = pneg %p33
      $region42: #{net_forward.1} parent=39 // pred_check_branch
        %230 = sbr.rel (%p228) target = $region44
      $region43: #{net_forward.1} parent=39 // pred_region
        %s231 = smul.u32 2, %s13
        %p232 = scmp.lt.s32.totalorder %s231, 3
        %s233 = scalar_select %p232, %s231, 3
        %s234 = smul.addr %s233, 19
        %s235 = smul.addr %s234, 8
        %s236 = scalar_lea.vmem %s0, %s235
        %s237 = smul.u32 2, %s13
      $region44: #{net_forward.1} parent=39 // pred_fallthru
        _
    $region40: #{net_forward.1} parent=5 // pred_fallthru
      _
    %p238 = scmp.le.s32.totalorder 1, %s13
    %p239 = scmp.lt.s32.totalorder %s13, 3
    %p240 = pnand %p238, %p239
    %p241 = pneg %p240
    // Predicated region
    $region45: #{net_forward.1} parent=5 // pred_check
      _
    $region46: #{net_forward.1} parent=5 // pred_check_branch
      %243 = sbr.rel (%p240) target = $region48
    $region47: #{net_forward.1} parent=5 // pred_region
      %s244 = ssub.s32 %s13, 1
      %s245 = smul.u32 2, %s18
      %p246 = scmp.lt.s32.totalorder %s245, 3
      %s247 = scalar_select %p246, %s245, 3
      %s248 = smul.addr %s247, 19
      %s249 = smul.addr %s248, 8
      %s250 = scalar_lea.vmem %s0, %s249
      %p251 = pneg %p39
      %p252 = pneg %p36
      %p253 = pneg %p60
      %p254 = pneg %p57
      %p255 = pneg %p81
      %p256 = pneg %p78
      %p257 = pneg %p102
      %p258 = pneg %p99
      %p259 = pneg %p123
      %p260 = pneg %p120
      %p261 = pneg %p144
      %p262 = pneg %p141
      %p263 = pneg %p165
      %p264 = pneg %p162
      %p265 = pneg %p191
      %p266 = pneg %p188
      %s267 = smul.u32 2, %s18
      %p268 = scmp.lt.s32.totalorder %s267, 3
      %s269 = scalar_select %p268, %s267, 3
      %s270 = smul.addr %s269, 8
      %s271 = smul.addr %s270, 8
      %s272 = scalar_lea.vmem %s7, %s271
      %s273 = smul.u32 2, %s18
      %p274 = scmp.lt.s32.totalorder %s273, 3
      %s275 = scalar_select %p274, %s273, 3
      %s276 = smul.addr %s275, 19
      %s277 = smul.addr %s276, 8
      %s278 = scalar_lea.vmem %s0, %s277
      %s279 = smul.u32 2, %s18
      %s280 = smul.u32 2, %s18
      %p281 = scmp.lt.s32.totalorder %s280, 3
      %s282 = scalar_select %p281, %s280, 3
      %s283 = smul.addr %s282, 8
      %s284 = smul.addr %s283, 8
      %s285 = scalar_lea.vmem %s7, %s284
      %s286 = smul.u32 2, %s18
      %v287 = vld [vmem:[%s1] sm:$0xff]
      %v288 = vld [vmem:[%s1 + $0x8] sm:$0xff]
      %v289 = vld [vmem:[%s1 + $0x10] sm:$0xff]
      %v290 = vld [vmem:[%s1 + $0x18] sm:$0xff]
      %v291 = vld [vmem:[%s1 + $0x20] sm:$0xff]
      %v292 = vld [vmem:[%s1 + $0x28] sm:$0xff]
      %v293 = vld [vmem:[%s1 + $0x30] sm:$0xff]
      %v294 = vld [vmem:[%s1 + $0x38] sm:$0xff]
      %v295 = vld [vmem:[%s1 + $0x40] sm:$0xff]
      %v296 = vld [vmem:[%s1 + $0x48] sm:$0xff]
      %v297 = vld [vmem:[%s1 + $0x50] sm:$0xff]
      %v298 = vld [vmem:[%s1 + $0x58] sm:$0xff]
      %v299 = vld [vmem:[%s1 + $0x60] sm:$0xff]
      %v300 = vld [vmem:[%s1 + $0x68] sm:$0xff]
      %v301 = vld [vmem:[%s1 + $0x70] sm:$0xff]
      %v302 = vld [vmem:[%s1 + $0x78] sm:$0xff]
      %v303 = vld [vmem:[%s5] sm:$0xff]
      %v304 = vld [vmem:[%s5 + $0x8] sm:$0xff]
      %v305 = vld [vmem:[%s5 + $0x10] sm:$0xff]
      %v306 = vld [vmem:[%s5 + $0x18] sm:$0xff]
      %v307 = vld [vmem:[%s5 + $0x20] sm:$0xff]
      %v308 = vld [vmem:[%s5 + $0x28] sm:$0xff]
      %v309 = vld [vmem:[%s5 + $0x30] sm:$0xff]
      %v310 = vld [vmem:[%s5 + $0x38] sm:$0xff]
      %v311 = vld [vmem:[%s5 + $0x40] sm:$0xff]
      %v312 = vld [vmem:[%s5 + $0x48] sm:$0xff]
      %v313 = vld [vmem:[%s5 + $0x50] sm:$0xff]
      %v314 = vld [vmem:[%s5 + $0x58] sm:$0xff]
      %v315 = vld [vmem:[%s5 + $0x60] sm:$0xff]
      %v316 = vld [vmem:[%s5 + $0x68] sm:$0x3f]
      %v317 = vld [vmem:[%s2] sm:$0xff]
      %v318 = vld [vmem:[%s2 + $0x8] sm:$0xff]
      %v319 = vld [vmem:[%s2 + $0x10] sm:$0xff]
      %v320 = vld [vmem:[%s2 + $0x18] sm:$0xff]
      %v321 = vld [vmem:[%s2 + $0x20] sm:$0xff]
      %v322 = vld [vmem:[%s2 + $0x28] sm:$0xff]
      %v323 = vld [vmem:[%s2 + $0x30] sm:$0xff]
      %v324 = vld [vmem:[%s2 + $0x38] sm:$0xff]
      %v325 = vld [vmem:[%s3] sm:$0xff]
      %v326 = vld [vmem:[%s3 + $0x8] sm:$0xff]
      %v327 = vld [vmem:[%s3 + $0x10] sm:$0xff]
      %v328 = vld [vmem:[%s3 + $0x18] sm:$0xff]
      %v329 = vld [vmem:[%s3 + $0x20] sm:$0xff]
      %v330 = vld [vmem:[%s3 + $0x28] sm:$0xff]
      %v331 = vld [vmem:[%s3 + $0x30] sm:$0xff]
      %v332 = vld [vmem:[%s3 + $0x38] sm:$0xff]
      %v333 = vld [vmem:[%s4] sm:$0xff]
      %v334 = vld [vmem:[%s4 + $0x8] sm:$0xff]
      %v335 = vld [vmem:[%s4 + $0x10] sm:$0xff]
      %v336 = vld [vmem:[%s4 + $0x18] sm:$0xff]
      %v337 = vld [vmem:[%s4 + $0x20] sm:$0xff]
      %v338 = vld [vmem:[%s4 + $0x28] sm:$0xff]
      %v339 = vld [vmem:[%s4 + $0x30] sm:$0xff]
      %v340 = vld [vmem:[%s4 + $0x38] sm:$0xff]
      %v341 = vld [vmem:[%s6] sm:$0x1]
      %v342 = vld [vmem:[%s278] sm:$0xff]
      %v343 = vld [vmem:[%s278 + $0x8] sm:$0xff]
      %v344 = vld [vmem:[%s278 + $0x10] sm:$0xff]
      %v345 = vld [vmem:[%s278 + $0x18] sm:$0xff]
      %v346 = vld [vmem:[%s278 + $0x20] sm:$0xff]
      %v347 = vld [vmem:[%s278 + $0x28] sm:$0xff]
      %v348 = vld [vmem:[%s278 + $0x30] sm:$0xff]
      %v349 = vld [vmem:[%s278 + $0x38] sm:$0xff]
      %v350 = vld [vmem:[%s278 + $0x40] sm:$0xff]
      %v351 = vld [vmem:[%s278 + $0x48] sm:$0xff]
      %v352 = vld [vmem:[%s278 + $0x50] sm:$0xff]
      %v353 = vld [vmem:[%s278 + $0x58] sm:$0xff]
      %v354 = vld [vmem:[%s278 + $0x60] sm:$0xff]
      %v355 = vld [vmem:[%s278 + $0x68] sm:$0xff]
      %v356 = vld [vmem:[%s278 + $0x70] sm:$0xff]
      %v357 = vld [vmem:[%s278 + $0x78] sm:$0xff]
      %v358 = vld [vmem:[%s278 + $0x80] sm:$0xff]
      %v359 = vld [vmem:[%s278 + $0x88] sm:$0xff]
      %v360 = vld [vmem:[%s278 + $0x90] sm:$0x7]
      %362 = vset.pattern.permute.xlu0 0
      %363 = vperm.xlu0 %362, %v317
      %v364 = vpop.permute.xlu0 %363
      %367 = vset.pattern.permute.xlu0 0
      %368 = vperm.xlu0 %367, %v318
      %v369 = vpop.permute.xlu0 %368
      %372 = vset.pattern.permute.xlu0 0
      %373 = vperm.xlu0 %372, %v319
      %v374 = vpop.permute.xlu0 %373
      %377 = vset.pattern.permute.xlu0 0
      %378 = vperm.xlu0 %377, %v320
      %v379 = vpop.permute.xlu0 %378
      %382 = vset.pattern.permute.xlu0 0
      %383 = vperm.xlu0 %382, %v321
      %v384 = vpop.permute.xlu0 %383
      %387 = vset.pattern.permute.xlu0 0
      %388 = vperm.xlu0 %387, %v322
      %v389 = vpop.permute.xlu0 %388
      %392 = vset.pattern.permute.xlu0 0
      %393 = vperm.xlu0 %392, %v323
      %v394 = vpop.permute.xlu0 %393
      %397 = vset.pattern.permute.xlu0 0
      %398 = vperm.xlu0 %397, %v324
      %v399 = vpop.permute.xlu0 %398
      %vm401 = vcmask 154624
      %v403 = vsel %vm401, %v288, 0
      %v406 = vsel %vm401, %v290, 0
      %v409 = vsel %vm401, %v292, 0
      %v412 = vsel %vm401, %v294, 0
      %v415 = vsel %vm401, %v296, 0
      %v418 = vsel %vm401, %v298, 0
      %v421 = vsel %vm401, %v300, 0
      %v424 = vsel %vm401, %v302, 0
      %vm426 = vcmask 1042432
      %v428 = vsel %vm426, %v360, 0
      %430 = vmatprep.subr.mxu0 0.0
      %431 = vmatpush1.msra.mxu0 %v357
      %432 = vmatprep.subr.mxu0 0.0
      %433 = vmatpush1.msra.mxu0 %v356
      %434 = vmatprep.subr.mxu0 0.0
      %435 = vmatpush1.msra.mxu0 %v355
      %436 = vmatprep.subr.mxu0 0.0
      %437 = vmatpush1.msra.mxu0 %v354
      %438 = vmatprep.subr.mxu0 0.0
      %439 = vmatpush1.msra.mxu0 %v353
      %440 = vmatprep.subr.mxu0 0.0
      %441 = vmatpush1.msra.mxu0 %v352
      %442 = vmatprep.subr.mxu0 0.0
      %443 = vmatpush1.msra.mxu0 %v351
      %444 = vmatprep.subr.mxu0 0.0
      %445 = vmatpush1.msra.mxu0 %v350
      %446 = vmatprep.subr.mxu0 0.0
      %447 = vmatpush1.msra.mxu0 %v349
      %448 = vmatprep.subr.mxu0 0.0
      %449 = vmatpush1.msra.mxu0 %v348
      %450 = vmatprep.subr.mxu0 0.0
      %451 = vmatpush1.msra.mxu0 %v347
      %452 = vmatprep.subr.mxu0 0.0
      %453 = vmatpush1.msra.mxu0 %v346
      %454 = vmatprep.subr.mxu0 0.0
      %455 = vmatpush1.msra.mxu0 %v345
      %456 = vmatprep.subr.mxu0 0.0
      %457 = vmatpush1.msra.mxu0 %v344
      %458 = vmatprep.subr.mxu0 0.0
      %459 = vmatpush1.msra.mxu0 %v343
      %460 = vmatprep.subr.mxu0 0.0
      %461 = vmatpush1.msra.mxu0 %v342
      %462 = vmatprep.subr.mxu0 0.0
      %463 = vmatpush2.msra.mxu0 0.0
      %464 = vmatprep.subr.mxu0 0.0
      %465 = vmatpush2.msra.mxu0 0.0
      %466 = vmatprep.subr.mxu0 0.0
      %467 = vmatpush2.msra.mxu0 0.0
      %468 = vmatprep.subr.mxu0 0.0
      %469 = vmatpush2.msra.mxu0 0.0
      %470 = vmatprep.subr.mxu0 0.0
      %471 = vmatpush2.msra.mxu0 0.0
      %472 = vmatprep.subr.mxu0 0.0
      %473 = vmatpush2.msra.mxu0 0.0
      %474 = vmatprep.subr.mxu0 0.0
      %475 = vmatpush2.msra.mxu0 0.0
      %476 = vmatprep.subr.mxu0 0.0
      %477 = vmatpush2.msra.mxu0 0.0
      %478 = vmatprep.subr.mxu0 0.0
      %479 = vmatpush2.msra.mxu0 0.0
      %480 = vmatprep.subr.mxu0 0.0
      %481 = vmatpush2.msra.mxu0 0.0
      %482 = vmatprep.subr.mxu0 0.0
      %483 = vmatpush2.msra.mxu0 0.0
      %484 = vmatprep.subr.mxu0 0.0
      %485 = vmatpush2.msra.mxu0 0.0
      %486 = vmatprep.subr.mxu0 0.0
      %487 = vmatpush2.msra.mxu0 0.0
      %488 = vmatprep.subr.mxu0 0.0
      %489 = vmatpush2.msra.mxu0 %v428
      %490 = vmatprep.subr.mxu0 0.0
      %491 = vmatpush2.msra.mxu0 %v359
      %492 = vmatprep.subr.mxu0 0.0
      %493 = vmatpush2.msra.mxu0 %v358
      %494 = vmatprep.mubr.f32.mxu0 %v403
      %495 = vmatmul.mubr.f32.gmra.mxu0 %v287
      %v496 = vpop.f32.mrf.mxu0
      %v497 = vadd.f32 %v364, %v496
      %v498 = vpop.f32.mrf.mxu0
      %499 = vmatprep.mubr.f32.mxu0 %v406
      %500 = vmatmul.mubr.f32.gmra.mxu0 %v289
      %v501 = vpop.f32.mrf.mxu0
      %v502 = vadd.f32 %v369, %v501
      %v503 = vpop.f32.mrf.mxu0
      %504 = vmatprep.mubr.f32.mxu0 %v409
      %505 = vmatmul.mubr.f32.gmra.mxu0 %v291
      %v506 = vpop.f32.mrf.mxu0
      %v507 = vadd.f32 %v374, %v506
      %v508 = vpop.f32.mrf.mxu0
      %509 = vmatprep.mubr.f32.mxu0 %v412
      %510 = vmatmul.mubr.f32.gmra.mxu0 %v293
      %v511 = vpop.f32.mrf.mxu0
      %v512 = vadd.f32 %v379, %v511
      %v513 = vpop.f32.mrf.mxu0
      %514 = vmatprep.mubr.f32.mxu0 %v415
      %515 = vmatmul.mubr.f32.gmra.mxu0 %v295
      %v516 = vpop.f32.mrf.mxu0
      %v517 = vadd.f32 %v384, %v516
      %v518 = vpop.f32.mrf.mxu0
      %519 = vmatprep.mubr.f32.mxu0 %v418
      %520 = vmatmul.mubr.f32.gmra.mxu0 %v297
      %v521 = vpop.f32.mrf.mxu0
      %v522 = vadd.f32 %v389, %v521
      %v523 = vpop.f32.mrf.mxu0
      %524 = vmatprep.mubr.f32.mxu0 %v421
      %525 = vmatmul.mubr.f32.gmra.mxu0 %v299
      %v526 = vpop.f32.mrf.mxu0
      %v527 = vadd.f32 %v394, %v526
      %v528 = vpop.f32.mrf.mxu0
      %529 = vmatprep.mubr.f32.mxu0 %v424
      %530 = vmatmul.mubr.f32.gmra.mxu0 %v301
      %v531 = vpop.f32.mrf.mxu0
      %v532 = vadd.f32 %v399, %v531
      %v533 = vpop.f32.mrf.mxu0
      %534 = vdwg.mxu0
      %v535 = vmax.f32 %v497, 0.0
      %v536 = vmax.f32 %v502, 0.0
      %v537 = vmax.f32 %v507, 0.0
      %v538 = vmax.f32 %v512, 0.0
      %v539 = vmax.f32 %v517, 0.0
      %v540 = vmax.f32 %v522, 0.0
      %v541 = vmax.f32 %v527, 0.0
      %v542 = vmax.f32 %v532, 0.0
      %544 = vset.pattern.permute.xlu0 0
      %545 = vperm.xlu0 %544, %v325
      %v546 = vpop.permute.xlu0 %545
      %549 = vset.pattern.permute.xlu0 0
      %550 = vperm.xlu0 %549, %v326
      %v551 = vpop.permute.xlu0 %550
      %554 = vset.pattern.permute.xlu0 0
      %555 = vperm.xlu0 %554, %v327
      %v556 = vpop.permute.xlu0 %555
      %559 = vset.pattern.permute.xlu0 0
      %560 = vperm.xlu0 %559, %v328
      %v561 = vpop.permute.xlu0 %560
      %564 = vset.pattern.permute.xlu0 0
      %565 = vperm.xlu0 %564, %v329
      %v566 = vpop.permute.xlu0 %565
      %569 = vset.pattern.permute.xlu0 0
      %570 = vperm.xlu0 %569, %v330
      %v571 = vpop.permute.xlu0 %570
      %574 = vset.pattern.permute.xlu0 0
      %575 = vperm.xlu0 %574, %v331
      %v576 = vpop.permute.xlu0 %575
      %579 = vset.pattern.permute.xlu0 0
      %580 = vperm.xlu0 %579, %v332
      %v581 = vpop.permute.xlu0 %580
      %v583 = vmul.f32 %v535, %v546
      %v584 = vmul.f32 %v536, %v551
      %v585 = vmul.f32 %v537, %v556
      %v586 = vmul.f32 %v538, %v561
      %v587 = vmul.f32 %v539, %v566
      %v588 = vmul.f32 %v540, %v571
      %v589 = vmul.f32 %v541, %v576
      %v590 = vmul.f32 %v542, %v581
      %592 = vset.pattern.permute.xlu0 0
      %593 = vperm.xlu0 %592, %v333
      %v594 = vpop.permute.xlu0 %593
      %597 = vset.pattern.permute.xlu0 0
      %598 = vperm.xlu0 %597, %v334
      %v599 = vpop.permute.xlu0 %598
      %602 = vset.pattern.permute.xlu0 0
      %603 = vperm.xlu0 %602, %v335
      %v604 = vpop.permute.xlu0 %603
      %607 = vset.pattern.permute.xlu0 0
      %608 = vperm.xlu0 %607, %v336
      %v609 = vpop.permute.xlu0 %608
      %612 = vset.pattern.permute.xlu0 0
      %613 = vperm.xlu0 %612, %v337
      %v614 = vpop.permute.xlu0 %613
      %617 = vset.pattern.permute.xlu0 0
      %618 = vperm.xlu0 %617, %v338
      %v619 = vpop.permute.xlu0 %618
      %622 = vset.pattern.permute.xlu0 0
      %623 = vperm.xlu0 %622, %v339
      %v624 = vpop.permute.xlu0 %623
      %627 = vset.pattern.permute.xlu0 0
      %628 = vperm.xlu0 %627, %v340
      %v629 = vpop.permute.xlu0 %628
      %v631 = vadd.f32 %v583, %v594
      %v632 = vadd.f32 %v584, %v599
      %v633 = vadd.f32 %v585, %v604
      %v634 = vadd.f32 %v586, %v609
      %v635 = vadd.f32 %v587, %v614
      %v636 = vadd.f32 %v588, %v619
      %v637 = vadd.f32 %v589, %v624
      %v638 = vadd.f32 %v590, %v629
      %v640 = vlaneseq
      %v641 = vshrl.u32 %v640, 7
      %v642 = vsub.s32 0, %v641
      %v643 = vrot.slane %v341, %v642
      %vm645 = vcmask 900096
      %v647 = vsel %vm645, %v631, 0
      %v650 = vsel %vm645, %v632, 0
      %v653 = vsel %vm645, %v633, 0
      %v656 = vsel %vm645, %v634, 0
      %v659 = vsel %vm645, %v635, 0
      %v662 = vsel %vm645, %v636, 0
      %v665 = vsel %vm645, %v637, 0
      %v668 = vsel %vm645, %v638, 0
      %vm670 = vcmask 1045504
      %v672 = vsel %vm670, %v316, 0
      %674 = vmatprep.subr.mxu0 0.0
      %675 = vmatpush1.msra.mxu0 0.0
      %676 = vmatprep.subr.mxu0 0.0
      %677 = vmatpush1.msra.mxu0 0.0
      %678 = vmatprep.subr.mxu0 0.0
      %679 = vmatpush1.msra.mxu0 %v672
      %680 = vmatprep.subr.mxu0 0.0
      %681 = vmatpush1.msra.mxu0 %v315
      %682 = vmatprep.subr.mxu0 0.0
      %683 = vmatpush1.msra.mxu0 %v314
      %684 = vmatprep.subr.mxu0 0.0
      %685 = vmatpush1.msra.mxu0 %v313
      %686 = vmatprep.subr.mxu0 0.0
      %687 = vmatpush1.msra.mxu0 %v312
      %688 = vmatprep.subr.mxu0 0.0
      %689 = vmatpush1.msra.mxu0 %v311
      %690 = vmatprep.subr.mxu0 0.0
      %691 = vmatpush1.msra.mxu0 %v310
      %692 = vmatprep.subr.mxu0 0.0
      %693 = vmatpush1.msra.mxu0 %v309
      %694 = vmatprep.subr.mxu0 0.0
      %695 = vmatpush1.msra.mxu0 %v308
      %696 = vmatprep.subr.mxu0 0.0
      %697 = vmatpush1.msra.mxu0 %v307
      %698 = vmatprep.subr.mxu0 0.0
      %699 = vmatpush1.msra.mxu0 %v306
      %700 = vmatprep.subr.mxu0 0.0
      %701 = vmatpush1.msra.mxu0 %v305
      %702 = vmatprep.subr.mxu0 0.0
      %703 = vmatpush1.msra.mxu0 %v304
      %704 = vmatprep.subr.mxu0 0.0
      %705 = vmatpush1.msra.mxu0 %v303
      %706 = vmatprep.subr.mxu0 0.0
      %707 = vmatpush2.msra.mxu0 0.0
      %708 = vmatprep.subr.mxu0 0.0
      %709 = vmatpush2.msra.mxu0 0.0
      %710 = vmatprep.subr.mxu0 0.0
      %711 = vmatpush2.msra.mxu0 0.0
      %712 = vmatprep.subr.mxu0 0.0
      %713 = vmatpush2.msra.mxu0 0.0
      %714 = vmatprep.subr.mxu0 0.0
      %715 = vmatpush2.msra.mxu0 0.0
      %716 = vmatprep.subr.mxu0 0.0
      %717 = vmatpush2.msra.mxu0 0.0
      %718 = vmatprep.subr.mxu0 0.0
      %719 = vmatpush2.msra.mxu0 0.0
      %720 = vmatprep.subr.mxu0 0.0
      %721 = vmatpush2.msra.mxu0 0.0
      %722 = vmatprep.subr.mxu0 0.0
      %723 = vmatpush2.msra.mxu0 0.0
      %724 = vmatprep.subr.mxu0 0.0
      %725 = vmatpush2.msra.mxu0 0.0
      %726 = vmatprep.subr.mxu0 0.0
      %727 = vmatpush2.msra.mxu0 0.0
      %728 = vmatprep.subr.mxu0 0.0
      %729 = vmatpush2.msra.mxu0 0.0
      %730 = vmatprep.subr.mxu0 0.0
      %731 = vmatpush2.msra.mxu0 0.0
      %732 = vmatprep.subr.mxu0 0.0
      %733 = vmatpush2.msra.mxu0 0.0
      %734 = vmatprep.subr.mxu0 0.0
      %735 = vmatpush2.msra.mxu0 0.0
      %736 = vmatprep.subr.mxu0 0.0
      %737 = vmatpush2.msra.mxu0 0.0
      %738 = vmatprep.mubr.f32.mxu0 0.0
      %739 = vmatmul.mubr.f32.gmra.mxu0 %v647
      %v740 = vpop.f32.mrf.mxu0
      %v741 = vadd.f32 %v643, %v740
      %v742 = vpop.f32.mrf.mxu0
      %743 = vmatprep.mubr.f32.mxu0 0.0
      %744 = vmatmul.mubr.f32.gmra.mxu0 %v650
      %v745 = vpop.f32.mrf.mxu0
      %v746 = vadd.f32 %v643, %v745
      %v747 = vpop.f32.mrf.mxu0
      %748 = vmatprep.mubr.f32.mxu0 0.0
      %749 = vmatmul.mubr.f32.gmra.mxu0 %v653
      %v750 = vpop.f32.mrf.mxu0
      %v751 = vadd.f32 %v643, %v750
      %v752 = vpop.f32.mrf.mxu0
      %753 = vmatprep.mubr.f32.mxu0 0.0
      %754 = vmatmul.mubr.f32.gmra.mxu0 %v656
      %v755 = vpop.f32.mrf.mxu0
      %v756 = vadd.f32 %v643, %v755
      %v757 = vpop.f32.mrf.mxu0
      %758 = vmatprep.mubr.f32.mxu0 0.0
      %759 = vmatmul.mubr.f32.gmra.mxu0 %v659
      %v760 = vpop.f32.mrf.mxu0
      %v761 = vadd.f32 %v643, %v760
      %v762 = vpop.f32.mrf.mxu0
      %763 = vmatprep.mubr.f32.mxu0 0.0
      %764 = vmatmul.mubr.f32.gmra.mxu0 %v662
      %v765 = vpop.f32.mrf.mxu0
      %v766 = vadd.f32 %v643, %v765
      %v767 = vpop.f32.mrf.mxu0
      %768 = vmatprep.mubr.f32.mxu0 0.0
      %769 = vmatmul.mubr.f32.gmra.mxu0 %v665
      %v770 = vpop.f32.mrf.mxu0
      %v771 = vadd.f32 %v643, %v770
      %v772 = vpop.f32.mrf.mxu0
      %773 = vmatprep.mubr.f32.mxu0 0.0
      %774 = vmatmul.mubr.f32.gmra.mxu0 %v668
      %v775 = vpop.f32.mrf.mxu0
      %v776 = vadd.f32 %v643, %v775
      %v777 = vpop.f32.mrf.mxu0
      %778 = vdwg.mxu0
      %vm779 = vcmask 244736
      %780 = vst.msk [vmem:[%s285] sm:$0xff] %vm779, %v741
      %781 = vst.msk [vmem:[%s285 + $0x8] sm:$0xff] %vm779, %v746
      %782 = vst.msk [vmem:[%s285 + $0x10] sm:$0xff] %vm779, %v751
      %783 = vst.msk [vmem:[%s285 + $0x18] sm:$0xff] %vm779, %v756
      %784 = vst.msk [vmem:[%s285 + $0x20] sm:$0xff] %vm779, %v761
      %785 = vst.msk [vmem:[%s285 + $0x28] sm:$0xff] %vm779, %v766
      %786 = vst.msk [vmem:[%s285 + $0x30] sm:$0xff] %vm779, %v771
      %787 = vst.msk [vmem:[%s285 + $0x38] sm:$0xff] %vm779, %v776
      %s788 = scalar_lea.vmem %s278, 152
      %v789 = vld [vmem:[%s788] sm:$0xff]
      %v790 = vld [vmem:[%s788 + $0x8] sm:$0xff]
      %v791 = vld [vmem:[%s788 + $0x10] sm:$0xff]
      %v792 = vld [vmem:[%s788 + $0x18] sm:$0xff]
      %v793 = vld [vmem:[%s788 + $0x20] sm:$0xff]
      %v794 = vld [vmem:[%s788 + $0x28] sm:$0xff]
      %v795 = vld [vmem:[%s788 + $0x30] sm:$0xff]
      %v796 = vld [vmem:[%s788 + $0x38] sm:$0xff]
      %v797 = vld [vmem:[%s788 + $0x40] sm:$0xff]
      %v798 = vld [vmem:[%s788 + $0x48] sm:$0xff]
      %v799 = vld [vmem:[%s788 + $0x50] sm:$0xff]
      %v800 = vld [vmem:[%s788 + $0x58] sm:$0xff]
      %v801 = vld [vmem:[%s788 + $0x60] sm:$0xff]
      %v802 = vld [vmem:[%s788 + $0x68] sm:$0xff]
      %v803 = vld [vmem:[%s788 + $0x70] sm:$0xff]
      %v804 = vld [vmem:[%s788 + $0x78] sm:$0xff]
      %v805 = vld [vmem:[%s788 + $0x80] sm:$0xff]
      %v806 = vld [vmem:[%s788 + $0x88] sm:$0xff]
      %v807 = vld [vmem:[%s788 + $0x90] sm:$0x7]
      %v809 = vsel %vm426, %v807, 0
      %811 = vmatprep.subr.mxu0 0.0
      %812 = vmatpush1.msra.mxu0 %v804
      %813 = vmatprep.subr.mxu0 0.0
      %814 = vmatpush1.msra.mxu0 %v803
      %815 = vmatprep.subr.mxu0 0.0
      %816 = vmatpush1.msra.mxu0 %v802
      %817 = vmatprep.subr.mxu0 0.0
      %818 = vmatpush1.msra.mxu0 %v801
      %819 = vmatprep.subr.mxu0 0.0
      %820 = vmatpush1.msra.mxu0 %v800
      %821 = vmatprep.subr.mxu0 0.0
      %822 = vmatpush1.msra.mxu0 %v799
      %823 = vmatprep.subr.mxu0 0.0
      %824 = vmatpush1.msra.mxu0 %v798
      %825 = vmatprep.subr.mxu0 0.0
      %826 = vmatpush1.msra.mxu0 %v797
      %827 = vmatprep.subr.mxu0 0.0
      %828 = vmatpush1.msra.mxu0 %v796
      %829 = vmatprep.subr.mxu0 0.0
      %830 = vmatpush1.msra.mxu0 %v795
      %831 = vmatprep.subr.mxu0 0.0
      %832 = vmatpush1.msra.mxu0 %v794
      %833 = vmatprep.subr.mxu0 0.0
      %834 = vmatpush1.msra.mxu0 %v793
      %835 = vmatprep.subr.mxu0 0.0
      %836 = vmatpush1.msra.mxu0 %v792
      %837 = vmatprep.subr.mxu0 0.0
      %838 = vmatpush1.msra.mxu0 %v791
      %839 = vmatprep.subr.mxu0 0.0
      %840 = vmatpush1.msra.mxu0 %v790
      %841 = vmatprep.subr.mxu0 0.0
      %842 = vmatpush1.msra.mxu0 %v789
      %843 = vmatprep.subr.mxu0 0.0
      %844 = vmatpush2.msra.mxu0 0.0
      %845 = vmatprep.subr.mxu0 0.0
      %846 = vmatpush2.msra.mxu0 0.0
      %847 = vmatprep.subr.mxu0 0.0
      %848 = vmatpush2.msra.mxu0 0.0
      %849 = vmatprep.subr.mxu0 0.0
      %850 = vmatpush2.msra.mxu0 0.0
      %851 = vmatprep.subr.mxu0 0.0
      %852 = vmatpush2.msra.mxu0 0.0
      %853 = vmatprep.subr.mxu0 0.0
      %854 = vmatpush2.msra.mxu0 0.0
      %855 = vmatprep.subr.mxu0 0.0
      %856 = vmatpush2.msra.mxu0 0.0
      %857 = vmatprep.subr.mxu0 0.0
      %858 = vmatpush2.msra.mxu0 0.0
      %859 = vmatprep.subr.mxu0 0.0
      %860 = vmatpush2.msra.mxu0 0.0
      %861 = vmatprep.subr.mxu0 0.0
      %862 = vmatpush2.msra.mxu0 0.0
      %863 = vmatprep.subr.mxu0 0.0
      %864 = vmatpush2.msra.mxu0 0.0
      %865 = vmatprep.subr.mxu0 0.0
      %866 = vmatpush2.msra.mxu0 0.0
      %867 = vmatprep.subr.mxu0 0.0
      %868 = vmatpush2.msra.mxu0 0.0
      %869 = vmatprep.subr.mxu0 0.0
      %870 = vmatpush2.msra.mxu0 %v809
      %871 = vmatprep.subr.mxu0 0.0
      %872 = vmatpush2.msra.mxu0 %v806
      %873 = vmatprep.subr.mxu0 0.0
      %874 = vmatpush2.msra.mxu0 %v805
      %875 = vmatprep.mubr.f32.mxu0 %v403
      %876 = vmatmul.mubr.f32.gmra.mxu0 %v287
      %v877 = vpop.f32.mrf.mxu0
      %v878 = vadd.f32 %v364, %v877
      %v879 = vpop.f32.mrf.mxu0
      %880 = vmatprep.mubr.f32.mxu0 %v406
      %881 = vmatmul.mubr.f32.gmra.mxu0 %v289
      %v882 = vpop.f32.mrf.mxu0
      %v883 = vadd.f32 %v369, %v882
      %v884 = vpop.f32.mrf.mxu0
      %885 = vmatprep.mubr.f32.mxu0 %v409
      %886 = vmatmul.mubr.f32.gmra.mxu0 %v291
      %v887 = vpop.f32.mrf.mxu0
      %v888 = vadd.f32 %v374, %v887
      %v889 = vpop.f32.mrf.mxu0
      %890 = vmatprep.mubr.f32.mxu0 %v412
      %891 = vmatmul.mubr.f32.gmra.mxu0 %v293
      %v892 = vpop.f32.mrf.mxu0
      %v893 = vadd.f32 %v379, %v892
      %v894 = vpop.f32.mrf.mxu0
      %895 = vmatprep.mubr.f32.mxu0 %v415
      %896 = vmatmul.mubr.f32.gmra.mxu0 %v295
      %v897 = vpop.f32.mrf.mxu0
      %v898 = vadd.f32 %v384, %v897
      %v899 = vpop.f32.mrf.mxu0
      %900 = vmatprep.mubr.f32.mxu0 %v418
      %901 = vmatmul.mubr.f32.gmra.mxu0 %v297
      %v902 = vpop.f32.mrf.mxu0
      %v903 = vadd.f32 %v389, %v902
      %v904 = vpop.f32.mrf.mxu0
      %905 = vmatprep.mubr.f32.mxu0 %v421
      %906 = vmatmul.mubr.f32.gmra.mxu0 %v299
      %v907 = vpop.f32.mrf.mxu0
      %v908 = vadd.f32 %v394, %v907
      %v909 = vpop.f32.mrf.mxu0
      %910 = vmatprep.mubr.f32.mxu0 %v424
      %911 = vmatmul.mubr.f32.gmra.mxu0 %v301
      %v912 = vpop.f32.mrf.mxu0
      %v913 = vadd.f32 %v399, %v912
      %v914 = vpop.f32.mrf.mxu0
      %915 = vdwg.mxu0
      %v916 = vmax.f32 %v878, 0.0
      %v917 = vmax.f32 %v883, 0.0
      %v918 = vmax.f32 %v888, 0.0
      %v919 = vmax.f32 %v893, 0.0
      %v920 = vmax.f32 %v898, 0.0
      %v921 = vmax.f32 %v903, 0.0
      %v922 = vmax.f32 %v908, 0.0
      %v923 = vmax.f32 %v913, 0.0
      %v924 = vmul.f32 %v916, %v546
      %v925 = vmul.f32 %v917, %v551
      %v926 = vmul.f32 %v918, %v556
      %v927 = vmul.f32 %v919, %v561
      %v928 = vmul.f32 %v920, %v566
      %v929 = vmul.f32 %v921, %v571
      %v930 = vmul.f32 %v922, %v576
      %v931 = vmul.f32 %v923, %v581
      %v932 = vadd.f32 %v924, %v594
      %v933 = vadd.f32 %v925, %v599
      %v934 = vadd.f32 %v926, %v604
      %v935 = vadd.f32 %v927, %v609
      %v936 = vadd.f32 %v928, %v614
      %v937 = vadd.f32 %v929, %v619
      %v938 = vadd.f32 %v930, %v624
      %v939 = vadd.f32 %v931, %v629
      %v941 = vsel %vm645, %v932, 0
      %v944 = vsel %vm645, %v933, 0
      %v947 = vsel %vm645, %v934, 0
      %v950 = vsel %vm645, %v935, 0
      %v953 = vsel %vm645, %v936, 0
      %v956 = vsel %vm645, %v937, 0
      %v959 = vsel %vm645, %v938, 0
      %v962 = vsel %vm645, %v939, 0
      %964 = vmatprep.subr.mxu0 0.0
      %965 = vmatpush1.msra.mxu0 0.0
      %966 = vmatprep.subr.mxu0 0.0
      %967 = vmatpush1.msra.mxu0 0.0
      %968 = vmatprep.subr.mxu0 0.0
      %969 = vmatpush1.msra.mxu0 %v672
      %970 = vmatprep.subr.mxu0 0.0
      %971 = vmatpush1.msra.mxu0 %v315
      %972 = vmatprep.subr.mxu0 0.0
      %973 = vmatpush1.msra.mxu0 %v314
      %974 = vmatprep.subr.mxu0 0.0
      %975 = vmatpush1.msra.mxu0 %v313
      %976 = vmatprep.subr.mxu0 0.0
      %977 = vmatpush1.msra.mxu0 %v312
      %978 = vmatprep.subr.mxu0 0.0
      %979 = vmatpush1.msra.mxu0 %v311
      %980 = vmatprep.subr.mxu0 0.0
      %981 = vmatpush1.msra.mxu0 %v310
      %982 = vmatprep.subr.mxu0 0.0
      %983 = vmatpush1.msra.mxu0 %v309
      %984 = vmatprep.subr.mxu0 0.0
      %985 = vmatpush1.msra.mxu0 %v308
      %986 = vmatprep.subr.mxu0 0.0
      %987 = vmatpush1.msra.mxu0 %v307
      %988 = vmatprep.subr.mxu0 0.0
      %989 = vmatpush1.msra.mxu0 %v306
      %990 = vmatprep.subr.mxu0 0.0
      %991 = vmatpush1.msra.mxu0 %v305
      %992 = vmatprep.subr.mxu0 0.0
      %993 = vmatpush1.msra.mxu0 %v304
      %994 = vmatprep.subr.mxu0 0.0
      %995 = vmatpush1.msra.mxu0 %v303
      %996 = vmatprep.subr.mxu0 0.0
      %997 = vmatpush2.msra.mxu0 0.0
      %998 = vmatprep.subr.mxu0 0.0
      %999 = vmatpush2.msra.mxu0 0.0
      %1000 = vmatprep.subr.mxu0 0.0
      %1001 = vmatpush2.msra.mxu0 0.0
      %1002 = vmatprep.subr.mxu0 0.0
      %1003 = vmatpush2.msra.mxu0 0.0
      %1004 = vmatprep.subr.mxu0 0.0
      %1005 = vmatpush2.msra.mxu0 0.0
      %1006 = vmatprep.subr.mxu0 0.0
      %1007 = vmatpush2.msra.mxu0 0.0
      %1008 = vmatprep.subr.mxu0 0.0
      %1009 = vmatpush2.msra.mxu0 0.0
      %1010 = vmatprep.subr.mxu0 0.0
      %1011 = vmatpush2.msra.mxu0 0.0
      %1012 = vmatprep.subr.mxu0 0.0
      %1013 = vmatpush2.msra.mxu0 0.0
      %1014 = vmatprep.subr.mxu0 0.0
      %1015 = vmatpush2.msra.mxu0 0.0
      %1016 = vmatprep.subr.mxu0 0.0
      %1017 = vmatpush2.msra.mxu0 0.0
      %1018 = vmatprep.subr.mxu0 0.0
      %1019 = vmatpush2.msra.mxu0 0.0
      %1020 = vmatprep.subr.mxu0 0.0
      %1021 = vmatpush2.msra.mxu0 0.0
      %1022 = vmatprep.subr.mxu0 0.0
      %1023 = vmatpush2.msra.mxu0 0.0
      %1024 = vmatprep.subr.mxu0 0.0
      %1025 = vmatpush2.msra.mxu0 0.0
      %1026 = vmatprep.subr.mxu0 0.0
      %1027 = vmatpush2.msra.mxu0 0.0
      %1028 = vmatprep.mubr.f32.mxu0 0.0
      %1029 = vmatmul.mubr.f32.gmra.mxu0 %v941
      %v1030 = vpop.f32.mrf.mxu0
      %v1031 = vadd.f32 %v643, %v1030
      %v1032 = vpop.f32.mrf.mxu0
      %1033 = vmatprep.mubr.f32.mxu0 0.0
      %1034 = vmatmul.mubr.f32.gmra.mxu0 %v944
      %v1035 = vpop.f32.mrf.mxu0
      %v1036 = vadd.f32 %v643, %v1035
      %v1037 = vpop.f32.mrf.mxu0
      %1038 = vmatprep.mubr.f32.mxu0 0.0
      %1039 = vmatmul.mubr.f32.gmra.mxu0 %v947
      %v1040 = vpop.f32.mrf.mxu0
      %v1041 = vadd.f32 %v643, %v1040
      %v1042 = vpop.f32.mrf.mxu0
      %1043 = vmatprep.mubr.f32.mxu0 0.0
      %1044 = vmatmul.mubr.f32.gmra.mxu0 %v950
      %v1045 = vpop.f32.mrf.mxu0
      %v1046 = vadd.f32 %v643, %v1045
      %v1047 = vpop.f32.mrf.mxu0
      %1048 = vmatprep.mubr.f32.mxu0 0.0
      %1049 = vmatmul.mubr.f32.gmra.mxu0 %v953
      %v1050 = vpop.f32.mrf.mxu0
      %v1051 = vadd.f32 %v643, %v1050
      %v1052 = vpop.f32.mrf.mxu0
      %1053 = vmatprep.mubr.f32.mxu0 0.0
      %1054 = vmatmul.mubr.f32.gmra.mxu0 %v956
      %v1055 = vpop.f32.mrf.mxu0
      %v1056 = vadd.f32 %v643, %v1055
      %v1057 = vpop.f32.mrf.mxu0
      %1058 = vmatprep.mubr.f32.mxu0 0.0
      %1059 = vmatmul.mubr.f32.gmra.mxu0 %v959
      %v1060 = vpop.f32.mrf.mxu0
      %v1061 = vadd.f32 %v643, %v1060
      %v1062 = vpop.f32.mrf.mxu0
      %1063 = vmatprep.mubr.f32.mxu0 0.0
      %1064 = vmatmul.mubr.f32.gmra.mxu0 %v962
      %v1065 = vpop.f32.mrf.mxu0
      %v1066 = vadd.f32 %v643, %v1065
      %v1067 = vpop.f32.mrf.mxu0
      %1068 = vdwg.mxu0
      %s1069 = scalar_lea.vmem %s285, 64
      %1070 = vst.msk [vmem:[%s1069] sm:$0xff] %vm779, %v1031
      %1071 = vst.msk [vmem:[%s1069 + $0x8] sm:$0xff] %vm779, %v1036
      %1072 = vst.msk [vmem:[%s1069 + $0x10] sm:$0xff] %vm779, %v1041
      %1073 = vst.msk [vmem:[%s1069 + $0x18] sm:$0xff] %vm779, %v1046
      %1074 = vst.msk [vmem:[%s1069 + $0x20] sm:$0xff] %vm779, %v1051
      %1075 = vst.msk [vmem:[%s1069 + $0x28] sm:$0xff] %vm779, %v1056
      %1076 = vst.msk [vmem:[%s1069 + $0x30] sm:$0xff] %vm779, %v1061
      %1077 = vst.msk [vmem:[%s1069 + $0x38] sm:$0xff] %vm779, %v1066
      %s1078 = smul.u32 2, %s18
      %p1079 = scmp.lt.s32.totalorder %s1078, 3
      %s1080 = scalar_select %p1079, %s1078, 3
      %s1081 = smul.addr %s1080, 8
      %s1082 = smul.addr %s1081, 8
      %s1083 = scalar_lea.vmem %s7, %s1082
      // Predicated region
      $region49: #{net_forward.1} parent=47 // pred_check
        %p1084 = pneg %p188
      $region50: #{net_forward.1} parent=47 // pred_check_branch
        %1086 = sbr.rel (%p1084) target = $region52
      $region51: #{net_forward.1} parent=47 // pred_region
        %s1087 = smul.u32 2, %s18
      $region52: #{net_forward.1} parent=47 // pred_fallthru
        _
    $region48: #{net_forward.1} parent=5 // pred_fallthru
      _
    %p1088 = scmp.le.s32.totalorder 2, %s13
    // Predicated region
    $region53: #{net_forward.1} parent=5 // pred_check
      %p1089 = pneg %p1088
    $region54: #{net_forward.1} parent=5 // pred_check_branch
      %1091 = sbr.rel (%p1089) target = $region56
    $region55: #{net_forward.1} parent=5 // pred_region
      %s1092 = ssub.s32 %s13, 2
      // Predicated region
      $region57: #{net_forward.1} parent=55 // pred_check
        %p1093 = pneg %p194
      $region58: #{net_forward.1} parent=55 // pred_check_branch
        %1095 = sbr.rel (%p1093) target = $region60
      $region59: #{net_forward.1} parent=55 // pred_region
        %s1096 = smul.u32 2, %s19
        %p1097 = scmp.lt.s32.totalorder %s1096, 3
        %s1098 = scalar_select %p1097, %s1096, 3
        %s1099 = smul.addr %s1098, 8
        %s1100 = smul.addr %s1099, 8
        %s1101 = scalar_lea.vmem %s7, %s1100
      $region60: #{net_forward.1} parent=55 // pred_fallthru
        _
    $region56: #{net_forward.1} parent=5 // pred_fallthru
      _
  $region6: #{net_forward.1} parent=0 // loop_footer
    %s17 = sadd.s32 1, %s13
  $region7: #{net_forward.1} parent=0 // loop_footer_branch
    %12 = sbr.rel target = $region3
  $region8: #{net_forward.1} parent=0 // loop_exit
    _

</llo_original>
